<compile_context>
chip_gen: v7x
topology: tpu7x:2x2x1
jax: 0.10.0
libtpu: 0.0.40
codegen_flags: <defaults>
</compile_context>

<pallas_src>
import functools

import jax
import jax.numpy as jnp
from jax.experimental import pallas as pl
from jax.experimental.pallas import tpu as pltpu


def _round_up(x, m):
    return (x + m - 1) // m * m


# ----------------------------------------------------------------------------
# Kernels
# ----------------------------------------------------------------------------
def _lstm_step_kernel(hp, xh_ref, c_ref, wxh_ref, bx_ref, wy_ref, by_ref,
                      y_ref, hc_ref):
    """Single LSTM-cell step. One fused gate matmul + output projection.

    xh_ref : (B, Kp)     [x | h] packed, zero-padded
    c_ref  : (B, Hp)     previous cell state, zero-padded
    wxh_ref: (Kp, 4*Hp)  stacked [Wx; Wh], gate order [i, f, o, c]
    bx_ref : (1, 4*Hp)   gate biases
    wy_ref : (Hp, Op)    output projection
    y_ref  : (B, Op)     lane-dense logits
    hc_ref : (B, 2*Hp)   lane-dense [h_new | c_new] slab
    """
    H = hp
    gates = (jnp.dot(xh_ref[...], wxh_ref[...],
                     preferred_element_type=jnp.float32) + bx_ref[...])

    i_g = jax.nn.sigmoid(gates[:, 0 * H:1 * H])
    f_g = jax.nn.sigmoid(gates[:, 1 * H:2 * H])
    o_g = jax.nn.sigmoid(gates[:, 2 * H:3 * H])
    c_t = jnp.tanh(gates[:, 3 * H:4 * H])

    c_new = f_g * c_ref[...] + i_g * c_t          # (B, Hp); pad cols stay 0
    h_new = o_g * jnp.tanh(c_new)                 # (B, Hp)

    y = (jnp.dot(h_new, wy_ref[...], preferred_element_type=jnp.float32)
         + by_ref[...])                           # (B, Op)

    y_ref[...] = y.astype(y_ref.dtype)
    hc_ref[:, :H] = h_new.astype(hc_ref.dtype)
    hc_ref[:, H:] = c_new.astype(hc_ref.dtype)


def _lstm_seq_kernel(hp, x_ref, h0_ref, c0_ref, wx_ref, wh_ref, bx_ref,
                     wy_ref, by_ref, y_ref, hc_ref, h_sc, c_sc):
    """T-step LSTM over grid=(T,): weights VMEM-resident, state in scratch."""
    H = hp
    t = pl.program_id(0)

    @pl.when(t == 0)
    def _():
        h_sc[...] = h0_ref[...]
        c_sc[...] = c0_ref[...]

    gates = (jnp.dot(x_ref[...], wx_ref[...],
                     preferred_element_type=jnp.float32)
             + bx_ref[...]
             + jnp.dot(h_sc[...], wh_ref[...],
                       preferred_element_type=jnp.float32))

    i_g = jax.nn.sigmoid(gates[:, 0 * H:1 * H])
    f_g = jax.nn.sigmoid(gates[:, 1 * H:2 * H])
    o_g = jax.nn.sigmoid(gates[:, 2 * H:3 * H])
    c_t = jnp.tanh(gates[:, 3 * H:4 * H])

    c_new = f_g * c_sc[...] + i_g * c_t
    h_new = o_g * jnp.tanh(c_new)
    h_sc[...] = h_new
    c_sc[...] = c_new

    y = (jnp.dot(h_new, wy_ref[...], preferred_element_type=jnp.float32)
         + by_ref[...])
    y_ref[...] = y.astype(y_ref.dtype)

    @pl.when(t == pl.num_programs(0) - 1)
    def _():
        hc_ref[:, :H] = h_new.astype(hc_ref.dtype)
        hc_ref[:, H:] = c_new.astype(hc_ref.dtype)


# ----------------------------------------------------------------------------
# One-time weight prepacking (hoisted out of the forward step)
# ----------------------------------------------------------------------------
def prepack_params(params, input_size, h_size, out_size):
    """Pack / pad weights once into lane-dense (in, out) layouts."""
    D, H, O = input_size, h_size, out_size
    Hp = _round_up(H, 128)
    Op = _round_up(O, 128)
    Dp = _round_up(D, 128)
    Kp = _round_up(D + H, 128)        # fused [x | h] contraction dim

    gates = ("i", "f", "o", "c")

    def pack_gates(prefix, rows):
        out = jnp.zeros((rows, 4 * Hp), jnp.float32)
        for k, g in enumerate(gates):
            w = params[f"{prefix}_{g}_w"].T          # (in, H)
            out = out.at[:w.shape[0], k * Hp:k * Hp + H].set(w)
        return out

    wx = pack_gates("Wx", Dp)                        # (Dp, 4Hp) for seq kernel
    wh = pack_gates("Wh", Hp)                        # (Hp, 4Hp)

    bx = jnp.zeros((1, 4 * Hp), jnp.float32)
    for k, g in enumerate(gates):
        bx = bx.at[0, k * Hp:k * Hp + H].set(params[f"Wx_{g}_b"])

    # Stacked [Wx; Wh] for the fused single-step matmul (K padded to Kp).
    wxh = jnp.zeros((Kp, 4 * Hp), jnp.float32)
    wxh = wxh.at[:D].set(wx[:D]).at[D:D + H].set(wh[:H])

    wy = jnp.zeros((Hp, Op), jnp.float32).at[:H, :O].set(params["Wy_w"].T)
    by = jnp.zeros((1, Op), jnp.float32).at[0, :O].set(params["Wy_b"])

    # TODO(synk): for large H on v6e/v7x, cast wx/wh/wy to bfloat16 here (keep
    # f32 accumulation) and tile 4*Hp with a grid to fit v7x's 64 MiB VMEM.
    return dict(D=D, H=H, O=O, Dp=Dp, Hp=Hp, Op=Op, Kp=Kp,
                wx=wx, wh=wh, wxh=wxh, bx=bx, wy=wy, by=by)


def _as_batched(state, B, H):
    state = jnp.asarray(state, jnp.float32)
    if state.ndim == 1:
        state = jnp.broadcast_to(state[None, :], (B, H))
    return state


# ----------------------------------------------------------------------------
# Wrappers
# ----------------------------------------------------------------------------
def lstm_classifier_forward(x, hidden, cell, packed):
    """One forward() step (matches the PyTorch module's forward)."""
    B = x.shape[0]
    D, H, O = packed["D"], packed["H"], packed["O"]
    Hp, Op, Kp = packed["Hp"], packed["Op"], packed["Kp"]

    h_b = _as_batched(hidden, B, H)
    c_b = _as_batched(cell, B, H)

    xh = jnp.zeros((B, Kp), jnp.float32)
    xh = xh.at[:, :D].set(x).at[:, D:D + H].set(h_b)
    c_prev = jnp.zeros((B, Hp), jnp.float32).at[:, :H].set(c_b)

    kernel = functools.partial(_lstm_step_kernel, Hp)
    y_pad, hc = pl.pallas_call(
        kernel,
        out_shape=(jax.ShapeDtypeStruct((B, Op), jnp.float32),
                   jax.ShapeDtypeStruct((B, 2 * Hp), jnp.float32)),
    )(xh, c_prev, packed["wxh"], packed["bx"], packed["wy"], packed["by"])

    return y_pad[:, :O], hc[:, :H], hc[:, Hp:Hp + H]


def lstm_classifier_forward_seq(x_seq, hidden, cell, packed):
    """Run T LSTM steps inside a single pallas_call (grid over time)."""
    T, B = x_seq.shape[0], x_seq.shape[1]
    D, H, O = packed["D"], packed["H"], packed["O"]
    Dp, Hp, Op = packed["Dp"], packed["Hp"], packed["Op"]

    x_p = jnp.zeros((T, B, Dp), jnp.float32).at[:, :, :D].set(x_seq)
    h0 = jnp.zeros((B, Hp), jnp.float32).at[:, :H].set(_as_batched(hidden, B, H))
    c0 = jnp.zeros((B, Hp), jnp.float32).at[:, :H].set(_as_batched(cell, B, H))

    kernel = functools.partial(_lstm_seq_kernel, Hp)
    grid_spec = pltpu.PrefetchScalarGridSpec(
        num_scalar_prefetch=0,
        grid=(T,),
        in_specs=[
            pl.BlockSpec((None, B, Dp), lambda t: (t, 0, 0)),   # x_t (per step)
            pl.BlockSpec((B, Hp), lambda t: (0, 0)),            # h0 (resident)
            pl.BlockSpec((B, Hp), lambda t: (0, 0)),            # c0 (resident)
            pl.BlockSpec((Dp, 4 * Hp), lambda t: (0, 0)),       # Wx (resident)
            pl.BlockSpec((Hp, 4 * Hp), lambda t: (0, 0)),       # Wh (resident)
            pl.BlockSpec((1, 4 * Hp), lambda t: (0, 0)),        # bx (resident)
            pl.BlockSpec((Hp, Op), lambda t: (0, 0)),           # Wy (resident)
            pl.BlockSpec((1, Op), lambda t: (0, 0)),            # by (resident)
        ],
        out_specs=[
            pl.BlockSpec((None, B, Op), lambda t: (t, 0, 0)),   # y_t
            pl.BlockSpec((B, 2 * Hp), lambda t: (0, 0)),        # final [h | c]
        ],
        scratch_shapes=[pltpu.VMEM((B, Hp), jnp.float32),       # h carry
                        pltpu.VMEM((B, Hp), jnp.float32)],      # c carry
    )
    y_pad, hc = pl.pallas_call(
        kernel,
        grid_spec=grid_spec,
        out_shape=(jax.ShapeDtypeStruct((T, B, Op), jnp.float32),
                   jax.ShapeDtypeStruct((B, 2 * Hp), jnp.float32)),
        compiler_params=pltpu.CompilerParams(
            dimension_semantics=("arbitrary",)),
    )(x_p, h0, c0, packed["wx"], packed["wh"], packed["bx"],
      packed["wy"], packed["by"])

    return y_pad[:, :, :O], hc[:, :H], hc[:, Hp:Hp + H]


# ----------------------------------------------------------------------------
# Params / reference
# ----------------------------------------------------------------------------
def _init_linear(key, out_features, in_features, bias=True):
    k_w, k_b = jax.random.split(key)
    bound = 1.0 / jnp.sqrt(jnp.float32(in_features))
    w = jax.random.uniform(k_w, (out_features, in_features),
                           minval=-bound, maxval=bound, dtype=jnp.float32)
    if bias:
        b = jax.random.uniform(k_b, (out_features,),
                               minval=-bound, maxval=bound, dtype=jnp.float32)
        return w, b
    return w, None


def init_params(key, input_size, h_size, out_size=2):
    keys = jax.random.split(key, 9)
    params = {}
    for name, k, (o, i), bias in [
        ("Wx_f", keys[0], (h_size, input_size), True),
        ("Wx_i", keys[1], (h_size, input_size), True),
        ("Wx_o", keys[2], (h_size, input_size), True),
        ("Wx_c", keys[3], (h_size, input_size), True),
        ("Wh_f", keys[4], (h_size, h_size), False),
        ("Wh_i", keys[5], (h_size, h_size), False),
        ("Wh_o", keys[6], (h_size, h_size), False),
        ("Wh_c", keys[7], (h_size, h_size), False),
        ("Wy",   keys[8], (out_size, h_size), True),
    ]:
        w, b = _init_linear(k, o, i, bias=bias)
        params[name + "_w"] = w
        if bias:
            params[name + "_b"] = b
    return params


def _reference_forward(x, hidden, cell, p):
    lin = lambda x_, w, b=None: x_ @ w.T + (b if b is not None else 0.0)
    i = jax.nn.sigmoid(lin(x, p["Wx_i_w"], p["Wx_i_b"]) + lin(hidden, p["Wh_i_w"]))
    f = jax.nn.sigmoid(lin(x, p["Wx_f_w"], p["Wx_f_b"]) + lin(hidden, p["Wh_f_w"]))
    o = jax.nn.sigmoid(lin(x, p["Wx_o_w"], p["Wx_o_b"]) + lin(hidden, p["Wh_o_w"]))
    c_til = jnp.tanh(lin(x, p["Wx_c_w"], p["Wx_c_b"]) + lin(hidden, p["Wh_c_w"]))
    cell_new = f * cell + i * c_til
    hidden_new = o * jnp.tanh(cell_new)
    y_hat = lin(hidden_new, p["Wy_w"], p["Wy_b"])
    return y_hat, hidden_new, cell_new


if __name__ == "__main__":
    key = jax.random.PRNGKey(0)
    k_param, k_x, k_seq = jax.random.split(key, 3)

    B, input_size, h_size, out_size, T = 2, 8, 32, 2, 8

    params = init_params(k_param, input_size, h_size, out_size)
    packed = prepack_params(params, input_size, h_size, out_size)  # one-time

    x = jax.random.normal(k_x, (B, input_size), dtype=jnp.float32)
    hidden = jnp.zeros((h_size,), dtype=jnp.float32)   # self.hidden
    cell = jnp.zeros((h_size,), dtype=jnp.float32)     # self.cell

    # --- single-step forward (exactly the module's forward) ---
    y_hat, h_new, c_new = lstm_classifier_forward(x, hidden, cell, packed)
    jax.block_until_ready((y_hat, h_new, c_new))

    y_ref, h_ref, c_ref = _reference_forward(x, hidden, cell, params)
    assert jnp.allclose(y_hat, y_ref, atol=1e-5, rtol=1e-5)
    assert jnp.allclose(h_new, h_ref, atol=1e-5, rtol=1e-5)
    assert jnp.allclose(c_new, c_ref, atol=1e-5, rtol=1e-5)

    # --- fused sequence forward: T repeated forward() calls in one kernel ---
    x_seq = jax.random.normal(k_seq, (T, B, input_size), dtype=jnp.float32)
    y_seq, h_T, c_T = lstm_classifier_forward_seq(x_seq, hidden, cell, packed)
    jax.block_until_ready((y_seq, h_T, c_T))

    h_r, c_r = hidden, cell
    y_refs = []
    for t in range(T):
        y_t, h_r, c_r = _reference_forward(x_seq[t], h_r, c_r, params)
        y_refs.append(y_t)
    y_seq_ref = jnp.stack(y_refs, axis=0)
    assert jnp.allclose(y_seq, y_seq_ref, atol=1e-4, rtol=1e-4)
    assert jnp.allclose(h_T, h_r, atol=1e-4, rtol=1e-4)
    assert jnp.allclose(c_T, c_r, atol=1e-4, rtol=1e-4)

    print("KERNEL_OK")
</pallas_src>

<mosaic_0001>
module attributes {stable_mosaic.version = 11 : i64} {
  func.func @_lstm_step_kernel(%arg0: memref<2x128xf32, #tpu.memory_space<vmem>>, %arg1: memref<2x128xf32, #tpu.memory_space<vmem>>, %arg2: memref<128x512xf32, #tpu.memory_space<vmem>>, %arg3: memref<1x512xf32, #tpu.memory_space<vmem>>, %arg4: memref<128x128xf32, #tpu.memory_space<vmem>>, %arg5: memref<1x128xf32, #tpu.memory_space<vmem>>, %arg6: memref<2x128xf32, #tpu.memory_space<vmem>>, %arg7: memref<2x256xf32, #tpu.memory_space<vmem>>) attributes {dimension_semantics = [], scalar_prefetch = 0 : i64, scratch_operands = 0 : i64, tpu.core_type = #tpu.core_type<tc>} {
    %c0 = arith.constant 0 : index
    %c0_0 = arith.constant 0 : index
    %0 = vector.load %arg0[%c0, %c0_0] : memref<2x128xf32, #tpu.memory_space<vmem>>, vector<2x128xf32>
    %c0_1 = arith.constant 0 : index
    %c0_2 = arith.constant 0 : index
    %1 = vector.load %arg2[%c0_1, %c0_2] : memref<128x512xf32, #tpu.memory_space<vmem>>, vector<128x512xf32>
    %cst = arith.constant dense<0.000000e+00> : vector<2x512xf32>
    %2 = tpu.matmul %0, %1, %cst {dimension_numbers = #tpu.dot_dimension_numbers<[1], [0], [0], [1], [0, 0, 1, 1], [], []>} : vector<2x128xf32>, vector<128x512xf32>, vector<2x512xf32> -> vector<2x512xf32>
    %c0_3 = arith.constant 0 : index
    %c0_4 = arith.constant 0 : index
    %3 = vector.load %arg3[%c0_3, %c0_4] : memref<1x512xf32, #tpu.memory_space<vmem>>, vector<1x512xf32>
    %4 = vector.broadcast %3 : vector<1x512xf32> to vector<2x512xf32>
    %5 = arith.addf %2, %4 : vector<2x512xf32>
    %6 = vector.extract_strided_slice %5 {offsets = [0, 0], sizes = [2, 128], strides = [1, 1]} : vector<2x512xf32> to vector<2x128xf32>
    %7 = arith.negf %6 : vector<2x128xf32>
    %8 = math.exp %7 : vector<2x128xf32>
    %cst_5 = arith.constant 1.000000e+00 : f32
    %9 = vector.broadcast %cst_5 : f32 to vector<2x128xf32>
    %10 = arith.addf %9, %8 : vector<2x128xf32>
    %11 = arith.divf %9, %10 : vector<2x128xf32>
    %12 = vector.extract_strided_slice %5 {offsets = [0, 128], sizes = [2, 128], strides = [1, 1]} : vector<2x512xf32> to vector<2x128xf32>
    %13 = arith.negf %12 : vector<2x128xf32>
    %14 = math.exp %13 : vector<2x128xf32>
    %cst_6 = arith.constant 1.000000e+00 : f32
    %15 = vector.broadcast %cst_6 : f32 to vector<2x128xf32>
    %16 = arith.addf %15, %14 : vector<2x128xf32>
    %17 = arith.divf %15, %16 : vector<2x128xf32>
    %18 = vector.extract_strided_slice %5 {offsets = [0, 256], sizes = [2, 128], strides = [1, 1]} : vector<2x512xf32> to vector<2x128xf32>
    %19 = arith.negf %18 : vector<2x128xf32>
    %20 = math.exp %19 : vector<2x128xf32>
    %cst_7 = arith.constant 1.000000e+00 : f32
    %21 = vector.broadcast %cst_7 : f32 to vector<2x128xf32>
    %22 = arith.addf %21, %20 : vector<2x128xf32>
    %23 = arith.divf %21, %22 : vector<2x128xf32>
    %24 = vector.extract_strided_slice %5 {offsets = [0, 384], sizes = [2, 128], strides = [1, 1]} : vector<2x512xf32> to vector<2x128xf32>
    %25 = math.tanh %24 : vector<2x128xf32>
    %c0_8 = arith.constant 0 : index
    %c0_9 = arith.constant 0 : index
    %26 = vector.load %arg1[%c0_8, %c0_9] : memref<2x128xf32, #tpu.memory_space<vmem>>, vector<2x128xf32>
    %27 = arith.mulf %17, %26 : vector<2x128xf32>
    %28 = arith.mulf %11, %25 : vector<2x128xf32>
    %29 = arith.addf %27, %28 : vector<2x128xf32>
    %30 = math.tanh %29 : vector<2x128xf32>
    %31 = arith.mulf %23, %30 : vector<2x128xf32>
    %c0_10 = arith.constant 0 : index
    %c0_11 = arith.constant 0 : index
    %32 = vector.load %arg4[%c0_10, %c0_11] : memref<128x128xf32, #tpu.memory_space<vmem>>, vector<128x128xf32>
    %cst_12 = arith.constant dense<0.000000e+00> : vector<2x128xf32>
    %33 = tpu.matmul %31, %32, %cst_12 {dimension_numbers = #tpu.dot_dimension_numbers<[1], [0], [0], [1], [0, 0, 1, 1], [], []>} : vector<2x128xf32>, vector<128x128xf32>, vector<2x128xf32> -> vector<2x128xf32>
    %c0_13 = arith.constant 0 : index
    %c0_14 = arith.constant 0 : index
    %34 = vector.load %arg5[%c0_13, %c0_14] : memref<1x128xf32, #tpu.memory_space<vmem>>, vector<1x128xf32>
    %35 = vector.broadcast %34 : vector<1x128xf32> to vector<2x128xf32>
    %36 = arith.addf %33, %35 : vector<2x128xf32>
    %c0_15 = arith.constant 0 : index
    %c0_16 = arith.constant 0 : index
    %37 = vector.load %arg6[%c0_15, %c0_16] : memref<2x128xf32, #tpu.memory_space<vmem>>, vector<2x128xf32>
    tpu.vector_store %arg6[%c0_15, %c0_16], %36 {strides = array<i32>} : memref<2x128xf32, #tpu.memory_space<vmem>>, vector<2x128xf32>,
    %c0_17 = arith.constant 0 : index
    %c0_18 = arith.constant 0 : index
    %38 = vector.load %arg7[%c0_17, %c0_18] : memref<2x256xf32, #tpu.memory_space<vmem>>, vector<2x128xf32>
    tpu.vector_store %arg7[%c0_17, %c0_18], %31 {strides = array<i32>} : memref<2x256xf32, #tpu.memory_space<vmem>>, vector<2x128xf32>,
    %c0_19 = arith.constant 0 : index
    %c128 = arith.constant 128 : index
    %39 = vector.load %arg7[%c0_19, %c128] : memref<2x256xf32, #tpu.memory_space<vmem>>, vector<2x128xf32>
    tpu.vector_store %arg7[%c0_19, %c128], %29 {strides = array<i32>} : memref<2x256xf32, #tpu.memory_space<vmem>>, vector<2x128xf32>,
    return
  }
}

</mosaic_0001>

<llo_original>
// kernel: tpu_custom_call.1
$region0: #{tpu_custom_call.1}
  #allocation0 [shape = 'u32[]', space=smem, size = 0x4, offset = 0x4, fixed_abs, tag = 'smem constant byte address 0x4 - core index']
  #allocation1 [shape = 'u32[144,128]{1,0:T(1,128)}', space=vmem, size = 0x12000, scoped, tag = 'internal scratch']
  %s0 = inlined_call_operand.hbm [shape: f32[2,128], index: 0, kind: input, shape index: {}]
  %s1 = inlined_call_operand.vmem [shape: f32[2,128], index: 1, kind: input, shape index: {}]
  %s2 = inlined_call_operand.hbm [shape: f32[128,512], index: 2, kind: input, shape index: {}]
  %s3 = inlined_call_operand.vmem [shape: f32[1,512], index: 3, kind: input, shape index: {}]
  %s4 = inlined_call_operand.hbm [shape: f32[128,128], index: 4, kind: input, shape index: {}]
  %s5 = inlined_call_operand.vmem [shape: f32[1,128], index: 5, kind: input, shape index: {}]
  %s6 = inlined_call_operand.hbm [shape: f32[2,128], index: 6, kind: output, shape index: {0}]
  %s7 = inlined_call_operand.hbm [shape: f32[2,256], index: 7, kind: output, shape index: {1}]
  %8 = xla_tuple %s6, %s7
  %s9 = sld [smem:[#allocation0]]
  $region54: #{tpu_custom_call.1} parent=0
    _
  %s11 = ssub.s32 1, %s9
  %s12 = scalar_select 0, %s11, %s9
  $region1: #{tpu_custom_call.1} parent=0
    #allocation2 [shape = 'u8[1024]{0}', space=vmem, size = 0x400, scoped, tag = 'input window, operand 0, single buffered']
    #allocation3 [shape = 's32[1]{0}', space=sflag, size = 0x4, scoped, tag = 'scoped memory for tpu_custom_call.1']
    #allocation4 [shape = 's32[1]{0}', space=sflag, size = 0x4, scoped, tag = 'scoped memory for tpu_custom_call.1']
    #allocation5 [shape = 'u8[262144]{0}', space=vmem, size = 0x40000, scoped, tag = 'input window, operand 2, single buffered']
    #allocation6 [shape = 's32[1]{0}', space=sflag, size = 0x4, scoped, tag = 'scoped memory for tpu_custom_call.1']
    #allocation7 [shape = 'u8[65536]{0}', space=vmem, size = 0x10000, scoped, tag = 'input window, operand 4, single buffered']
    #allocation8 [shape = 'u8[1024]{0}', space=vmem, size = 0x400, scoped, tag = 'output window, operand 0, single buffered']
    #allocation9 [shape = 'u8[2048]{0}', space=vmem, size = 0x800, scoped, tag = 'output window, operand 1, single buffered']
    #allocation10 [shape = 's32[1]{0}', space=sflag, size = 0x4, scoped, tag = 'scoped memory for tpu_custom_call.1']
    %13 = vsyncpa [#allocation3], 0
    %14 = vsyncpa [#allocation6], 0
    %15 = vsyncpa [#allocation4], 0
    %16 = vsyncpa [#allocation10], 0
    // Predicated region
    $region2: #{tpu_custom_call.1} parent=1 // pred_check
      _
    $region3: #{tpu_custom_call.1} parent=1 // pred_check_branch
      %18 = sbr.rel (0) target = $region5
    $region4: #{tpu_custom_call.1} parent=1 // pred_region
      %s20 = ssub.s32 32, 32
      %21 = vsyncadd [#allocation3], %s20
      %s23 = sshll.u32 [#allocation2], 4
      %s24 = int_to_ptr.vmem [resolvable:$true] %s23
      %26 = dma.hbm_to_vmem [thread:$0]  %s0, 32, %s24, [#allocation3]
    $region5: #{tpu_custom_call.1} parent=1 // pred_fallthru
      _
    // Predicated region
    $region6: #{tpu_custom_call.1} parent=1 // pred_check
      _
    $region7: #{tpu_custom_call.1} parent=1 // pred_check_branch
      %28 = sbr.rel (0) target = $region9
    $region8: #{tpu_custom_call.1} parent=1 // pred_region
      _
    $region9: #{tpu_custom_call.1} parent=1 // pred_fallthru
      _
    // Predicated region
    $region10: #{tpu_custom_call.1} parent=1 // pred_check
      _
    $region11: #{tpu_custom_call.1} parent=1 // pred_check_branch
      %30 = sbr.rel (0) target = $region13
    $region12: #{tpu_custom_call.1} parent=1 // pred_region
      %s32 = ssub.s32 8192, 8192
      %33 = vsyncadd [#allocation6], %s32
      %s34 = sshll.u32 [#allocation5], 4
      %s35 = int_to_ptr.vmem [resolvable:$true] %s34
      %40 = dma.hbm_to_vmem [thread:$0]  %s2, 8192, %s35, [#allocation6], 512, 512, 32
    $region13: #{tpu_custom_call.1} parent=1 // pred_fallthru
      _
    // Predicated region
    $region14: #{tpu_custom_call.1} parent=1 // pred_check
      _
    $region15: #{tpu_custom_call.1} parent=1 // pred_check_branch
      %42 = sbr.rel (0) target = $region17
    $region16: #{tpu_custom_call.1} parent=1 // pred_region
      _
    $region17: #{tpu_custom_call.1} parent=1 // pred_fallthru
      _
    // Predicated region
    $region18: #{tpu_custom_call.1} parent=1 // pred_check
      _
    $region19: #{tpu_custom_call.1} parent=1 // pred_check_branch
      %44 = sbr.rel (0) target = $region21
    $region20: #{tpu_custom_call.1} parent=1 // pred_region
      %s46 = ssub.s32 2048, 2048
      %47 = vsyncadd [#allocation6], %s46
      %s48 = sshll.u32 [#allocation7], 4
      %s49 = int_to_ptr.vmem [resolvable:$true] %s48
      %54 = dma.hbm_to_vmem [thread:$0]  %s4, 2048, %s49, [#allocation6], 128, 128, 8
    $region21: #{tpu_custom_call.1} parent=1 // pred_fallthru
      _
    // Predicated region
    $region22: #{tpu_custom_call.1} parent=1 // pred_check
      _
    $region23: #{tpu_custom_call.1} parent=1 // pred_check_branch
      %56 = sbr.rel (0) target = $region25
    $region24: #{tpu_custom_call.1} parent=1 // pred_region
      _
    $region25: #{tpu_custom_call.1} parent=1 // pred_fallthru
      _
    // Predicated region
    $region26: #{tpu_custom_call.1} parent=1 // pred_check
      _
    $region27: #{tpu_custom_call.1} parent=1 // pred_check_branch
      %58 = sbr.rel (0) target = $region29
    $region28: #{tpu_custom_call.1} parent=1 // pred_region
      %59 = dma.done [#allocation3], 32
    $region29: #{tpu_custom_call.1} parent=1 // pred_fallthru
      _
    // Predicated region
    $region30: #{tpu_custom_call.1} parent=1 // pred_check
      _
    $region31: #{tpu_custom_call.1} parent=1 // pred_check_branch
      %61 = sbr.rel (0) target = $region33
    $region32: #{tpu_custom_call.1} parent=1 // pred_region
      %62 = dma.done [#allocation6], 8192
    $region33: #{tpu_custom_call.1} parent=1 // pred_fallthru
      _
    // Predicated region
    $region34: #{tpu_custom_call.1} parent=1 // pred_check
      _
    $region35: #{tpu_custom_call.1} parent=1 // pred_check_branch
      %64 = sbr.rel (0) target = $region37
    $region36: #{tpu_custom_call.1} parent=1 // pred_region
      %65 = dma.done [#allocation6], 2048
    $region37: #{tpu_custom_call.1} parent=1 // pred_fallthru
      _
    %v66 = vld [vmem:[#allocation2] sm:$0x3]
    %v67 = vld [vmem:[#allocation5] sm:$0xff]
    %v68 = vld [vmem:[#allocation5 + $0x8] sm:$0xff]
    %v69 = vld [vmem:[#allocation5 + $0x10] sm:$0xff]
    %v70 = vld [vmem:[#allocation5 + $0x18] sm:$0xff]
    %v71 = vld [vmem:[#allocation5 + $0x20] sm:$0xff]
    %v72 = vld [vmem:[#allocation5 + $0x28] sm:$0xff]
    %v73 = vld [vmem:[#allocation5 + $0x30] sm:$0xff]
    %v74 = vld [vmem:[#allocation5 + $0x38] sm:$0xff]
    %v75 = vld [vmem:[#allocation5 + $0x40] sm:$0xff]
    %v76 = vld [vmem:[#allocation5 + $0x48] sm:$0xff]
    %v77 = vld [vmem:[#allocation5 + $0x50] sm:$0xff]
    %v78 = vld [vmem:[#allocation5 + $0x58] sm:$0xff]
    %v79 = vld [vmem:[#allocation5 + $0x60] sm:$0xff]
    %v80 = vld [vmem:[#allocation5 + $0x68] sm:$0xff]
    %v81 = vld [vmem:[#allocation5 + $0x70] sm:$0xff]
    %v82 = vld [vmem:[#allocation5 + $0x78] sm:$0xff]
    %v83 = vld [vmem:[#allocation5 + $0x80] sm:$0xff]
    %v84 = vld [vmem:[#allocation5 + $0x88] sm:$0xff]
    %v85 = vld [vmem:[#allocation5 + $0x90] sm:$0xff]
    %v86 = vld [vmem:[#allocation5 + $0x98] sm:$0xff]
    %v87 = vld [vmem:[#allocation5 + $0xa0] sm:$0xff]
    %v88 = vld [vmem:[#allocation5 + $0xa8] sm:$0xff]
    %v89 = vld [vmem:[#allocation5 + $0xb0] sm:$0xff]
    %v90 = vld [vmem:[#allocation5 + $0xb8] sm:$0xff]
    %v91 = vld [vmem:[#allocation5 + $0xc0] sm:$0xff]
    %v92 = vld [vmem:[#allocation5 + $0xc8] sm:$0xff]
    %v93 = vld [vmem:[#allocation5 + $0xd0] sm:$0xff]
    %v94 = vld [vmem:[#allocation5 + $0xd8] sm:$0xff]
    %v95 = vld [vmem:[#allocation5 + $0xe0] sm:$0xff]
    %v96 = vld [vmem:[#allocation5 + $0xe8] sm:$0xff]
    %v97 = vld [vmem:[#allocation5 + $0xf0] sm:$0xff]
    %v98 = vld [vmem:[#allocation5 + $0xf8] sm:$0xff]
    %v99 = vld [vmem:[#allocation5 + $0x100] sm:$0xff]
    %v100 = vld [vmem:[#allocation5 + $0x108] sm:$0xff]
    %v101 = vld [vmem:[#allocation5 + $0x110] sm:$0xff]
    %v102 = vld [vmem:[#allocation5 + $0x118] sm:$0xff]
    %v103 = vld [vmem:[#allocation5 + $0x120] sm:$0xff]
    %v104 = vld [vmem:[#allocation5 + $0x128] sm:$0xff]
    %v105 = vld [vmem:[#allocation5 + $0x130] sm:$0xff]
    %v106 = vld [vmem:[#allocation5 + $0x138] sm:$0xff]
    %v107 = vld [vmem:[#allocation5 + $0x140] sm:$0xff]
    %v108 = vld [vmem:[#allocation5 + $0x148] sm:$0xff]
    %v109 = vld [vmem:[#allocation5 + $0x150] sm:$0xff]
    %v110 = vld [vmem:[#allocation5 + $0x158] sm:$0xff]
    %v111 = vld [vmem:[#allocation5 + $0x160] sm:$0xff]
    %v112 = vld [vmem:[#allocation5 + $0x168] sm:$0xff]
    %v113 = vld [vmem:[#allocation5 + $0x170] sm:$0xff]
    %v114 = vld [vmem:[#allocation5 + $0x178] sm:$0xff]
    %v115 = vld [vmem:[#allocation5 + $0x180] sm:$0xff]
    %v116 = vld [vmem:[#allocation5 + $0x188] sm:$0xff]
    %v117 = vld [vmem:[#allocation5 + $0x190] sm:$0xff]
    %v118 = vld [vmem:[#allocation5 + $0x198] sm:$0xff]
    %v119 = vld [vmem:[#allocation5 + $0x1a0] sm:$0xff]
    %v120 = vld [vmem:[#allocation5 + $0x1a8] sm:$0xff]
    %v121 = vld [vmem:[#allocation5 + $0x1b0] sm:$0xff]
    %v122 = vld [vmem:[#allocation5 + $0x1b8] sm:$0xff]
    %v123 = vld [vmem:[#allocation5 + $0x1c0] sm:$0xff]
    %v124 = vld [vmem:[#allocation5 + $0x1c8] sm:$0xff]
    %v125 = vld [vmem:[#allocation5 + $0x1d0] sm:$0xff]
    %v126 = vld [vmem:[#allocation5 + $0x1d8] sm:$0xff]
    %v127 = vld [vmem:[#allocation5 + $0x1e0] sm:$0xff]
    %v128 = vld [vmem:[#allocation5 + $0x1e8] sm:$0xff]
    %v129 = vld [vmem:[#allocation5 + $0x1f0] sm:$0xff]
    %v130 = vld [vmem:[#allocation5 + $0x1f8] sm:$0xff]
    %v131 = vld [vmem:[%s3] sm:$0xf]
    %v133 = vlaneseq
    %v134 = vshrl.u32 %v133, 7
    %v135 = vsub.s32 0, %v134
    %v136 = vrot.slane %v131, %v135
    %v137 = vlaneseq
    %v138 = vshrl.u32 %v137, 7
    %v139 = vsub.s32 1, %v138
    %v140 = vrot.slane %v131, %v139
    %v141 = vlaneseq
    %v142 = vshrl.u32 %v141, 7
    %v143 = vsub.s32 2, %v142
    %v144 = vrot.slane %v131, %v143
    %v145 = vlaneseq
    %v146 = vshrl.u32 %v145, 7
    %v147 = vsub.s32 3, %v146
    %v148 = vrot.slane %v131, %v147
    %153 = vmatprep.subr.mxu0 %v68
    %154 = vmatpush1.msra.mxu0 %v67
    %155 = vmatprep.subr.mxu0 %v72
    %156 = vmatpush1.msra.mxu0 %v71
    %157 = vmatprep.subr.mxu0 %v76
    %158 = vmatpush1.msra.mxu0 %v75
    %159 = vmatprep.subr.mxu0 %v80
    %160 = vmatpush1.msra.mxu0 %v79
    %161 = vmatprep.subr.mxu0 %v84
    %162 = vmatpush1.msra.mxu0 %v83
    %163 = vmatprep.subr.mxu0 %v88
    %164 = vmatpush1.msra.mxu0 %v87
    %165 = vmatprep.subr.mxu0 %v92
    %166 = vmatpush1.msra.mxu0 %v91
    %167 = vmatprep.subr.mxu0 %v96
    %168 = vmatpush1.msra.mxu0 %v95
    %169 = vmatprep.subr.mxu0 %v100
    %170 = vmatpush1.msra.mxu0 %v99
    %171 = vmatprep.subr.mxu0 %v104
    %172 = vmatpush1.msra.mxu0 %v103
    %173 = vmatprep.subr.mxu0 %v108
    %174 = vmatpush1.msra.mxu0 %v107
    %175 = vmatprep.subr.mxu0 %v112
    %176 = vmatpush1.msra.mxu0 %v111
    %177 = vmatprep.subr.mxu0 %v116
    %178 = vmatpush1.msra.mxu0 %v115
    %179 = vmatprep.subr.mxu0 %v120
    %180 = vmatpush1.msra.mxu0 %v119
    %181 = vmatprep.subr.mxu0 %v124
    %182 = vmatpush1.msra.mxu0 %v123
    %183 = vmatprep.subr.mxu0 %v128
    %184 = vmatpush1.msra.mxu0 %v127
    %185 = vmatprep.subr.mxu0 0.0
    %186 = vmatpush1.msra.mxu0 0.0
    %187 = vmatprep.subr.mxu0 0.0
    %188 = vmatpush1.msra.mxu0 0.0
    %189 = vmatprep.subr.mxu0 0.0
    %190 = vmatpush1.msra.mxu0 0.0
    %191 = vmatprep.subr.mxu0 0.0
    %192 = vmatpush1.msra.mxu0 0.0
    %193 = vmatprep.subr.mxu0 0.0
    %194 = vmatpush1.msra.mxu0 0.0
    %195 = vmatprep.subr.mxu0 0.0
    %196 = vmatpush1.msra.mxu0 0.0
    %197 = vmatprep.subr.mxu0 0.0
    %198 = vmatpush1.msra.mxu0 0.0
    %199 = vmatprep.subr.mxu0 0.0
    %200 = vmatpush1.msra.mxu0 0.0
    %201 = vmatprep.subr.mxu0 0.0
    %202 = vmatpush1.msra.mxu0 0.0
    %203 = vmatprep.subr.mxu0 0.0
    %204 = vmatpush1.msra.mxu0 0.0
    %205 = vmatprep.subr.mxu0 0.0
    %206 = vmatpush1.msra.mxu0 0.0
    %207 = vmatprep.subr.mxu0 0.0
    %208 = vmatpush1.msra.mxu0 0.0
    %209 = vmatprep.subr.mxu0 0.0
    %210 = vmatpush1.msra.mxu0 0.0
    %211 = vmatprep.subr.mxu0 0.0
    %212 = vmatpush1.msra.mxu0 0.0
    %213 = vmatprep.subr.mxu0 0.0
    %214 = vmatpush1.msra.mxu0 0.0
    %215 = vmatprep.subr.mxu0 0.0
    %216 = vmatpush1.msra.mxu0 0.0
    %217 = vmatprep.mubr.f32.mxu0 0.0
    %218 = vmatmul.mubr.f32.gmra.mrb[0].mxu0 %v66
    %v219 = vpop.f32.mrb[0].mxu0
    %v220 = vadd.f32 %v136, %v219
    %v221 = vpop.f32.mrb[0].mxu0
    %v222 = vadd.f32 %v140, %v221
    %223 = vdwg.mxu0
    %224 = vmatprep.subr.mxu0 %v70
    %225 = vmatpush1.msra.mxu0 %v69
    %226 = vmatprep.subr.mxu0 %v74
    %227 = vmatpush1.msra.mxu0 %v73
    %228 = vmatprep.subr.mxu0 %v78
    %229 = vmatpush1.msra.mxu0 %v77
    %230 = vmatprep.subr.mxu0 %v82
    %231 = vmatpush1.msra.mxu0 %v81
    %232 = vmatprep.subr.mxu0 %v86
    %233 = vmatpush1.msra.mxu0 %v85
    %234 = vmatprep.subr.mxu0 %v90
    %235 = vmatpush1.msra.mxu0 %v89
    %236 = vmatprep.subr.mxu0 %v94
    %237 = vmatpush1.msra.mxu0 %v93
    %238 = vmatprep.subr.mxu0 %v98
    %239 = vmatpush1.msra.mxu0 %v97
    %240 = vmatprep.subr.mxu0 %v102
    %241 = vmatpush1.msra.mxu0 %v101
    %242 = vmatprep.subr.mxu0 %v106
    %243 = vmatpush1.msra.mxu0 %v105
    %244 = vmatprep.subr.mxu0 %v110
    %245 = vmatpush1.msra.mxu0 %v109
    %246 = vmatprep.subr.mxu0 %v114
    %247 = vmatpush1.msra.mxu0 %v113
    %248 = vmatprep.subr.mxu0 %v118
    %249 = vmatpush1.msra.mxu0 %v117
    %250 = vmatprep.subr.mxu0 %v122
    %251 = vmatpush1.msra.mxu0 %v121
    %252 = vmatprep.subr.mxu0 %v126
    %253 = vmatpush1.msra.mxu0 %v125
    %254 = vmatprep.subr.mxu0 %v130
    %255 = vmatpush1.msra.mxu0 %v129
    %256 = vmatprep.subr.mxu0 0.0
    %257 = vmatpush1.msra.mxu0 0.0
    %258 = vmatprep.subr.mxu0 0.0
    %259 = vmatpush1.msra.mxu0 0.0
    %260 = vmatprep.subr.mxu0 0.0
    %261 = vmatpush1.msra.mxu0 0.0
    %262 = vmatprep.subr.mxu0 0.0
    %263 = vmatpush1.msra.mxu0 0.0
    %264 = vmatprep.subr.mxu0 0.0
    %265 = vmatpush1.msra.mxu0 0.0
    %266 = vmatprep.subr.mxu0 0.0
    %267 = vmatpush1.msra.mxu0 0.0
    %268 = vmatprep.subr.mxu0 0.0
    %269 = vmatpush1.msra.mxu0 0.0
    %270 = vmatprep.subr.mxu0 0.0
    %271 = vmatpush1.msra.mxu0 0.0
    %272 = vmatprep.subr.mxu0 0.0
    %273 = vmatpush1.msra.mxu0 0.0
    %274 = vmatprep.subr.mxu0 0.0
    %275 = vmatpush1.msra.mxu0 0.0
    %276 = vmatprep.subr.mxu0 0.0
    %277 = vmatpush1.msra.mxu0 0.0
    %278 = vmatprep.subr.mxu0 0.0
    %279 = vmatpush1.msra.mxu0 0.0
    %280 = vmatprep.subr.mxu0 0.0
    %281 = vmatpush1.msra.mxu0 0.0
    %282 = vmatprep.subr.mxu0 0.0
    %283 = vmatpush1.msra.mxu0 0.0
    %284 = vmatprep.subr.mxu0 0.0
    %285 = vmatpush1.msra.mxu0 0.0
    %286 = vmatprep.subr.mxu0 0.0
    %287 = vmatpush1.msra.mxu0 0.0
    %288 = vmatprep.mubr.f32.mxu0 0.0
    %289 = vmatmul.mubr.f32.gmra.mrb[0].mxu0 %v66
    %v290 = vpop.f32.mrb[0].mxu0
    %v291 = vadd.f32 %v144, %v290
    %v292 = vpop.f32.mrb[0].mxu0
    %v293 = vadd.f32 %v148, %v292
    %294 = vdwg.mxu0
    %v295 = vxor.u32 %v220, 2147483648
    %v296 = vmul.f32 %v295, 1.442695
    %v297 = vpow.pop %v296
    %v298 = vadd.f32 %v297, 1.0
    %v299 = vrcp.pop %v298
    %v300 = vmul.f32 1.0, %v299
    %v301 = vxor.u32 %v222, 2147483648
    %v302 = vmul.f32 %v301, 1.442695
    %v303 = vpow.pop %v302
    %v304 = vadd.f32 %v303, 1.0
    %v305 = vrcp.pop %v304
    %v306 = vmul.f32 1.0, %v305
    %v307 = vxor.u32 %v291, 2147483648
    %v308 = vmul.f32 %v307, 1.442695
    %v309 = vpow.pop %v308
    %v310 = vadd.f32 %v309, 1.0
    %v311 = vrcp.pop %v310
    %v312 = vmul.f32 1.0, %v311
    %v313 = vtanh.pop %v293
    %v314 = vld [vmem:[%s1] sm:$0x3]
    %v315 = vmul.f32 %v306, %v314
    %v316 = vmul.f32 %v300, %v313
    %v317 = vadd.f32 %v315, %v316
    %v318 = vtanh.pop %v317
    %v319 = vmul.f32 %v312, %v318
    %v320 = vld [vmem:[#allocation7] sm:$0xff]
    %v321 = vld [vmem:[#allocation7 + $0x8] sm:$0xff]
    %v322 = vld [vmem:[#allocation7 + $0x10] sm:$0xff]
    %v323 = vld [vmem:[#allocation7 + $0x18] sm:$0xff]
    %v324 = vld [vmem:[#allocation7 + $0x20] sm:$0xff]
    %v325 = vld [vmem:[#allocation7 + $0x28] sm:$0xff]
    %v326 = vld [vmem:[#allocation7 + $0x30] sm:$0xff]
    %v327 = vld [vmem:[#allocation7 + $0x38] sm:$0xff]
    %v328 = vld [vmem:[#allocation7 + $0x40] sm:$0xff]
    %v329 = vld [vmem:[#allocation7 + $0x48] sm:$0xff]
    %v330 = vld [vmem:[#allocation7 + $0x50] sm:$0xff]
    %v331 = vld [vmem:[#allocation7 + $0x58] sm:$0xff]
    %v332 = vld [vmem:[#allocation7 + $0x60] sm:$0xff]
    %v333 = vld [vmem:[#allocation7 + $0x68] sm:$0xff]
    %v334 = vld [vmem:[#allocation7 + $0x70] sm:$0xff]
    %v335 = vld [vmem:[#allocation7 + $0x78] sm:$0xff]
    %v336 = vld [vmem:[%s5] sm:$0x1]
    %v338 = vlaneseq
    %v339 = vshrl.u32 %v338, 7
    %v340 = vsub.s32 0, %v339
    %v341 = vrot.slane %v336, %v340
    %343 = vmatprep.subr.mxu0 0.0
    %344 = vmatpush1.msra.mxu0 %v320
    %345 = vmatprep.subr.mxu0 0.0
    %346 = vmatpush1.msra.mxu0 %v321
    %347 = vmatprep.subr.mxu0 0.0
    %348 = vmatpush1.msra.mxu0 %v322
    %349 = vmatprep.subr.mxu0 0.0
    %350 = vmatpush1.msra.mxu0 %v323
    %351 = vmatprep.subr.mxu0 0.0
    %352 = vmatpush1.msra.mxu0 %v324
    %353 = vmatprep.subr.mxu0 0.0
    %354 = vmatpush1.msra.mxu0 %v325
    %355 = vmatprep.subr.mxu0 0.0
    %356 = vmatpush1.msra.mxu0 %v326
    %357 = vmatprep.subr.mxu0 0.0
    %358 = vmatpush1.msra.mxu0 %v327
    %359 = vmatprep.subr.mxu0 0.0
    %360 = vmatpush1.msra.mxu0 %v328
    %361 = vmatprep.subr.mxu0 0.0
    %362 = vmatpush1.msra.mxu0 %v329
    %363 = vmatprep.subr.mxu0 0.0
    %364 = vmatpush1.msra.mxu0 %v330
    %365 = vmatprep.subr.mxu0 0.0
    %366 = vmatpush1.msra.mxu0 %v331
    %367 = vmatprep.subr.mxu0 0.0
    %368 = vmatpush1.msra.mxu0 %v332
    %369 = vmatprep.subr.mxu0 0.0
    %370 = vmatpush1.msra.mxu0 %v333
    %371 = vmatprep.subr.mxu0 0.0
    %372 = vmatpush1.msra.mxu0 %v334
    %373 = vmatprep.subr.mxu0 0.0
    %374 = vmatpush1.msra.mxu0 %v335
    %375 = vmatprep.subr.mxu0 0.0
    %376 = vmatpush1.msra.mxu0 0.0
    %377 = vmatprep.subr.mxu0 0.0
    %378 = vmatpush1.msra.mxu0 0.0
    %379 = vmatprep.subr.mxu0 0.0
    %380 = vmatpush1.msra.mxu0 0.0
    %381 = vmatprep.subr.mxu0 0.0
    %382 = vmatpush1.msra.mxu0 0.0
    %383 = vmatprep.subr.mxu0 0.0
    %384 = vmatpush1.msra.mxu0 0.0
    %385 = vmatprep.subr.mxu0 0.0
    %386 = vmatpush1.msra.mxu0 0.0
    %387 = vmatprep.subr.mxu0 0.0
    %388 = vmatpush1.msra.mxu0 0.0
    %389 = vmatprep.subr.mxu0 0.0
    %390 = vmatpush1.msra.mxu0 0.0
    %391 = vmatprep.subr.mxu0 0.0
    %392 = vmatpush1.msra.mxu0 0.0
    %393 = vmatprep.subr.mxu0 0.0
    %394 = vmatpush1.msra.mxu0 0.0
    %395 = vmatprep.subr.mxu0 0.0
    %396 = vmatpush1.msra.mxu0 0.0
    %397 = vmatprep.subr.mxu0 0.0
    %398 = vmatpush1.msra.mxu0 0.0
    %399 = vmatprep.subr.mxu0 0.0
    %400 = vmatpush1.msra.mxu0 0.0
    %401 = vmatprep.subr.mxu0 0.0
    %402 = vmatpush1.msra.mxu0 0.0
    %403 = vmatprep.subr.mxu0 0.0
    %404 = vmatpush1.msra.mxu0 0.0
    %405 = vmatprep.subr.mxu0 0.0
    %406 = vmatpush1.msra.mxu0 0.0
    %407 = vmatprep.mubr.f32.mxu0 0.0
    %408 = vmatmul.mubr.f32.gmra.mrb[0].mxu0 %v319
    %v409 = vpop.f32.mrb[0].mxu0
    %v410 = vadd.f32 %v341, %v409
    %v411 = vpop.f32.mrb[0].mxu0
    %412 = vdwg.mxu0
    %413 = vst [vmem:[#allocation8] sm:$0x3] %v410
    %414 = vst [vmem:[#allocation9] sm:$0x3] %v319
    %415 = vst [vmem:[#allocation9 + $0x2] sm:$0x3] %v317
    // Predicated region
    $region38: #{tpu_custom_call.1} parent=1 // pred_check
      _
    $region39: #{tpu_custom_call.1} parent=1 // pred_check_branch
      %417 = sbr.rel (0) target = $region41
    $region40: #{tpu_custom_call.1} parent=1 // pred_region
      %s419 = ssub.s32 32, 32
      %420 = vsyncadd [#allocation4], %s419
      %s422 = sshll.u32 [#allocation8], 4
      %s423 = int_to_ptr.vmem [resolvable:$true] %s422
      %425 = dma.vmem_to_hbm [thread:$0]  %s423, 32, %s6, [#allocation4]
    $region41: #{tpu_custom_call.1} parent=1 // pred_fallthru
      _
    // Predicated region
    $region42: #{tpu_custom_call.1} parent=1 // pred_check
      _
    $region43: #{tpu_custom_call.1} parent=1 // pred_check_branch
      %427 = sbr.rel (0) target = $region45
    $region44: #{tpu_custom_call.1} parent=1 // pred_region
      %s429 = ssub.s32 64, 64
      %430 = vsyncadd [#allocation10], %s429
      %s432 = sshll.u32 [#allocation9], 4
      %s433 = int_to_ptr.vmem [resolvable:$true] %s432
      %435 = dma.vmem_to_hbm [thread:$0]  %s433, 64, %s7, [#allocation10]
    $region45: #{tpu_custom_call.1} parent=1 // pred_fallthru
      _
    // Predicated region
    $region46: #{tpu_custom_call.1} parent=1 // pred_check
      _
    $region47: #{tpu_custom_call.1} parent=1 // pred_check_branch
      %437 = sbr.rel (0) target = $region49
    $region48: #{tpu_custom_call.1} parent=1 // pred_region
      %438 = dma.done [#allocation4], 32
    $region49: #{tpu_custom_call.1} parent=1 // pred_fallthru
      _
    // Predicated region
    $region50: #{tpu_custom_call.1} parent=1 // pred_check
      _
    $region51: #{tpu_custom_call.1} parent=1 // pred_check_branch
      %440 = sbr.rel (0) target = $region53
    $region52: #{tpu_custom_call.1} parent=1 // pred_region
      %441 = dma.done [#allocation10], 64
    $region53: #{tpu_custom_call.1} parent=1 // pred_fallthru
      _
    %442 = vsyncpa [#allocation3], 1
    %443 = vsyncpa [#allocation6], 1
    %444 = vsyncpa [#allocation4], 1
    %445 = vsyncpa [#allocation10], 1

</llo_original>
